<compile_context>
chip_gen: v7x
topology: tpu7x:2x2x1
jax: 0.10.0
libtpu: 0.0.40
codegen_flags: <defaults>
</compile_context>

<pallas_src>
import jax
import jax.numpy as jnp
from jax.experimental import pallas as pl
from jax.experimental.pallas import tpu as pltpu


def _round_up(x, m):
    return -(-x // m) * m


def _make_glal_kernel(num_classes, num_backbones, group_stride):
    """Per-tile kernel for fixed (num_classes, num_backbones, padded group)."""
    C, K, Cpad = num_classes, num_backbones, group_stride

    def kernel(*refs):
        xw_ref = refs[0]
        xl_ref = refs[1]
        xs_refs = refs[2:2 + (K - 1)]
        (w1_ref, b1_ref, w2_ref, b2_ref,
         w3_ref, b3_ref) = refs[2 + (K - 1):8 + (K - 1)]
        out_ref = refs[-1]

        # nn.ReLU() applied to side_w before the conv stack.
        x = jnp.maximum(xw_ref[...], 0.0)                          # [Cin, T]

        # ConvModule 1: 1x1 conv (MXU, f32 accumulation) + bias + ReLU.
        h = jnp.dot(w1_ref[...], x, preferred_element_type=jnp.float32)
        h = jnp.maximum(h + b1_ref[...], 0.0)                      # [Cout, T]

        # ConvModule 2: 1x1 conv + bias + ReLU.
        h = jnp.dot(w2_ref[...], h, preferred_element_type=jnp.float32)
        h = jnp.maximum(h + b2_ref[...], 0.0)

        # ConvModule 3: 1x1 conv + bias (no act), then Sigmoid (EUP).
        # w3/b3 rows were permuted to backbone-major order and padded so each
        # backbone group starts on a sublane-tile boundary.
        h = jnp.dot(w3_ref[...], h, preferred_element_type=jnp.float32)
        att = jax.nn.sigmoid(h + b3_ref[...])                      # [K*Cpad, T]

        # Gate + per-class reduction over the K backbones: K-1 VPU FMAs.
        acc = xl_ref[...] * att[0:C, :]          # backbone 0 <- side_l[:, c]
        for k in range(1, K):
            base = k * Cpad                      # sublane-tile aligned slice
            acc = acc + xs_refs[k - 1][...] * att[base:base + C, :]
        out_ref[...] = acc.astype(out_ref.dtype)                   # [C, T]

    return kernel


def _pick_tile(hw, batch, max_tile_cols):
    """Wide, 128-aligned lane tiles with a cdiv grid (partial last block)."""
    if hw <= 128:
        return hw, 1                       # full extent (== array dim)
    hw_pad = _round_up(hw, 128)
    tile = max(128, (min(max_tile_cols, hw_pad) // 128) * 128)
    # v7x megacore: with batch == 1 keep >= 2 parallel grid steps so both
    # TensorCores get work; never shrink a step below ~2048 lanes.
    if batch == 1 and tile >= hw_pad and hw_pad >= 2 * 2048:
        tile = _round_up(hw_pad // 2, 128)
    if tile >= hw:
        tile = hw                          # full extent (allowed as-is)
    return tile, -(-hw // tile)


def glal_pallas(sides, params, *, num_sides, max_tile_cols=16384,
                out_dtype=jnp.float32):
    """sides: list of NCHW float32 arrays, len == num_sides + 1.  Last entry
    is side_w, second-to-last is side_l, the rest are single-channel side
    maps.  params = (w1, b1, w2, b2, w3, b3), weights stored as
    [out_ch, in_ch] (PyTorch conv weight minus the trailing 1x1 dims)."""
    assert isinstance(sides, list)
    assert len(sides) == num_sides + 1, f"number of sides: {len(sides)}"

    side_w = sides[-1]
    side_l = sides[-2]
    rest = sides[:-2]                      # each [B, 1, H, W]
    K = len(sides) - 1                     # num_backbones == num_sides

    B, C, H, W = side_l.shape
    Cin = side_w.shape[1]
    Cout = C * K
    HW = H * W

    assert side_w.shape == (B, Cin, H, W), side_w.shape
    for t in rest:
        assert t.shape == (B, 1, H, W), t.shape

    w1, b1, w2, b2, w3, b3 = params
    assert w1.shape == (Cout, Cin), w1.shape
    assert w2.shape == (Cout, Cout), w2.shape
    assert w3.shape == (Cout, Cout), w3.shape
    assert b1.shape == (Cout,) and b2.shape == (Cout,) and b3.shape == (Cout,)

    # ---- free reshapes: NCHW -> [B, C, H*W]; channels on sublanes ----
    # No concat, no dtype cast: the kernel reads the caller's arrays directly.
    xw = side_w.reshape(B, Cin, HW)
    xl = side_l.reshape(B, C, HW)
    xs = [t.reshape(B, 1, HW) for t in rest]

    # Permute the last conv's output rows to backbone-major order and pad each
    # backbone group up to the f32 sublane tile (8 rows):
    #   att[k*Cpad + c] == att_orig[c*K + k]   for c < C; padded rows are dead.
    Cpad = _round_up(C, 8) if (C % 8) else C
    Cout_p = K * Cpad
    rows_dst = jnp.asarray([k * Cpad + c for k in range(K) for c in range(C)],
                           dtype=jnp.int32)
    rows_src = jnp.asarray([c * K + k for k in range(K) for c in range(C)],
                           dtype=jnp.int32)
    w3p = jnp.zeros((Cout_p, Cout), w3.dtype).at[rows_dst].set(w3[rows_src])
    b3p = jnp.zeros((Cout_p,), b3.dtype).at[rows_dst].set(b3[rows_src])

    b1c = b1.reshape(Cout, 1)
    b2c = b2.reshape(Cout, 1)
    b3c = b3p.reshape(Cout_p, 1)

    # ---- lane-tile selection + grid ----
    tile, n_tiles = _pick_tile(HW, B, max_tile_cols)
    grid = (B, n_tiles)

    def data_spec(ch):
        return pl.BlockSpec((pl.Squeezed(), ch, tile), lambda b, t: (b, 0, t))

    def const_spec(r, c):
        return pl.BlockSpec((r, c), lambda b, t: (0, 0))

    in_specs = [data_spec(Cin), data_spec(C)] + [data_spec(1)] * (K - 1)
    inputs = [xw, xl] + xs
    in_specs += [
        const_spec(Cout, Cin),    # w1
        const_spec(Cout, 1),      # b1
        const_spec(Cout, Cout),   # w2
        const_spec(Cout, 1),      # b2
        const_spec(Cout_p, Cout),  # w3 (permuted + sublane-padded)
        const_spec(Cout_p, 1),     # b3 (permuted + sublane-padded)
    ]
    inputs += [w1, b1c, w2, b2c, w3p, b3c]

    # Scoped-VMEM budget: double-buffered I/O slabs + f32 intermediates.
    # Set explicitly (v5e scoped default is 16 MiB); cap at v7x's 64 MiB.
    out_bytes = jnp.dtype(out_dtype).itemsize
    per_col = (4 * 2 * (Cin + C + (K - 1))          # double-buffered inputs
               + out_bytes * 2 * C                  # double-buffered output
               + 4 * (Cin + 2 * Cout + Cout_p + C))  # f32 intermediates
    const_bytes = 4 * 2 * (Cout * Cin + Cout * Cout + Cout_p * Cout
                           + 2 * Cout + Cout_p)
    vmem_limit = int(min(64 << 20,
                         max(32 << 20, 2 * (tile * per_col + const_bytes))))

    out = pl.pallas_call(
        _make_glal_kernel(C, K, Cpad),
        out_shape=jax.ShapeDtypeStruct((B, C, HW), out_dtype),
        grid_spec=pltpu.PrefetchScalarGridSpec(
            num_scalar_prefetch=0,
            grid=grid,
            in_specs=in_specs,
            out_specs=data_spec(C),
        ),
        compiler_params=pltpu.CompilerParams(
            dimension_semantics=("parallel", "parallel"),
            vmem_limit_bytes=vmem_limit),
    )(*inputs)

    return out.reshape(B, C, H, W)         # free reshape back to NCHW


# ---------------- pure-JAX reference (mirrors the PyTorch forward) ----------------
def glal_reference(sides, params, *, num_sides):
    side_w = sides[-1]
    side_l = sides[-2]
    rest = sides[:-2]
    num_backbones = len(sides) - 1
    num_classes = side_l.shape[1]

    fuse_parts = []
    for c in range(num_classes):
        fuse_parts.append(side_l[:, c:c + 1])
        fuse_parts.extend(rest)
    fuse = jnp.concatenate(fuse_parts, axis=1)

    w1, b1, w2, b2, w3, b3 = params

    def conv1x1(x, w, b):   # w: [out, in]
        return jnp.einsum('bihw,oi->bohw', x, w) + b[None, :, None, None]

    h = jnp.maximum(side_w, 0.0)
    h = jnp.maximum(conv1x1(h, w1, b1), 0.0)
    h = jnp.maximum(conv1x1(h, w2, b2), 0.0)
    att = jax.nn.sigmoid(conv1x1(h, w3, b3))

    B, _, H, W = att.shape
    att = att.reshape(B, num_classes, num_backbones, H, W)
    fuse = fuse.reshape(B, num_classes, num_backbones, H, W)
    return jnp.sum(fuse * att, axis=2)


def _make_inputs(key, *, num_sides, num_classes, in_channels, B, H, W):
    K = num_sides
    out_channels = num_classes * K
    keys = jax.random.split(key, K + 7)

    rest = [jax.random.normal(keys[i], (B, 1, H, W), jnp.float32)
            for i in range(K - 1)]
    side_l = jax.random.normal(keys[K - 1], (B, num_classes, H, W), jnp.float32)
    side_w = jax.random.normal(keys[K], (B, in_channels, H, W), jnp.float32)
    sides = rest + [side_l, side_w]

    def init_w(k, fan_out, fan_in):
        return (jax.random.normal(k, (fan_out, fan_in), jnp.float32)
                / jnp.sqrt(jnp.float32(fan_in)))

    kw = keys[K + 1:]
    w1 = init_w(kw[0], out_channels, in_channels)
    b1 = 0.01 * jax.random.normal(kw[1], (out_channels,), jnp.float32)
    w2 = init_w(kw[2], out_channels, out_channels)
    b2 = 0.01 * jax.random.normal(kw[3], (out_channels,), jnp.float32)
    w3 = init_w(kw[4], out_channels, out_channels)
    b3 = 0.01 * jax.random.normal(kw[5], (out_channels,), jnp.float32)
    return sides, (w1, b1, w2, b2, w3, b3)


if __name__ == "__main__":
    key = jax.random.PRNGKey(0)
    k1, k2, k3, k4 = jax.random.split(key, 4)

    # Case 1: main config — B=2, 4 classes, 3 backbones, 8-ch side_w, 16x16.
    sides, params = _make_inputs(k1, num_sides=3, num_classes=4,
                                 in_channels=8, B=2, H=16, W=16)
    out = jax.block_until_ready(glal_pallas(sides, params, num_sides=3))
    ref = jax.block_until_ready(glal_reference(sides, params, num_sides=3))
    assert out.shape == (2, 4, 16, 16), out.shape
    assert jnp.allclose(out, ref, atol=1e-4, rtol=1e-4), \
        float(jnp.max(jnp.abs(out - ref)))

    # bf16 *output* mode (halves output HBM traffic; compute stays f32).
    out_bf16 = jax.block_until_ready(
        glal_pallas(sides, params, num_sides=3, out_dtype=jnp.bfloat16))
    assert out_bf16.dtype == jnp.bfloat16
    assert bool(jnp.all(jnp.isfinite(out_bf16.astype(jnp.float32))))
    assert jnp.allclose(out_bf16.astype(jnp.float32), ref, atol=2e-2, rtol=2e-2)

    # Case 2: exercises spatial tiling (H*W = 1024, tile = 512 -> 2 lane tiles).
    sides2, params2 = _make_inputs(k2, num_sides=2, num_classes=4,
                                   in_channels=8, B=1, H=32, W=32)
    out2 = jax.block_until_ready(
        glal_pallas(sides2, params2, num_sides=2, max_tile_cols=512))
    ref2 = glal_reference(sides2, params2, num_sides=2)
    assert jnp.allclose(out2, ref2, atol=1e-4, rtol=1e-4), \
        float(jnp.max(jnp.abs(out2 - ref2)))

    # Case 3: degenerate single-backbone config (no extra side maps).
    sides3, params3 = _make_inputs(k3, num_sides=1, num_classes=4,
                                   in_channels=8, B=1, H=16, W=16)
    out3 = jax.block_until_ready(glal_pallas(sides3, params3, num_sides=1))
    ref3 = glal_reference(sides3, params3, num_sides=1)
    assert jnp.allclose(out3, ref3, atol=1e-4, rtol=1e-4), \
        float(jnp.max(jnp.abs(out3 - ref3)))

    # Case 4: H*W not a multiple of the tile (480 lanes, tile 256) ->
    # cdiv grid with a partial (masked-DMA) last block.
    sides4, params4 = _make_inputs(k4, num_sides=2, num_classes=4,
                                   in_channels=8, B=1, H=20, W=24)
    out4 = jax.block_until_ready(
        glal_pallas(sides4, params4, num_sides=2, max_tile_cols=256))
    ref4 = glal_reference(sides4, params4, num_sides=2)
    assert jnp.allclose(out4, ref4, atol=1e-4, rtol=1e-4), \
        float(jnp.max(jnp.abs(out4 - ref4)))

    print("KERNEL_OK")
</pallas_src>

<mosaic_0001>
module attributes {stable_mosaic.version = 11 : i64} {
  func.func @kernel(%arg0: i32, %arg1: i32, %arg2: memref<1x8x256xf32, #tpu.memory_space<vmem>>, %arg3: memref<1x4x256xf32, #tpu.memory_space<vmem>>, %arg4: memref<1x1x256xf32, #tpu.memory_space<vmem>>, %arg5: memref<1x1x256xf32, #tpu.memory_space<vmem>>, %arg6: memref<12x8xf32, #tpu.memory_space<vmem>>, %arg7: memref<12x1xf32, #tpu.memory_space<vmem>>, %arg8: memref<12x12xf32, #tpu.memory_space<vmem>>, %arg9: memref<12x1xf32, #tpu.memory_space<vmem>>, %arg10: memref<24x12xf32, #tpu.memory_space<vmem>>, %arg11: memref<24x1xf32, #tpu.memory_space<vmem>>, %arg12: memref<1x4x256xf32, #tpu.memory_space<vmem>>) attributes {dimension_semantics = [#tpu.dimension_semantics<parallel>, #tpu.dimension_semantics<parallel>], iteration_bounds = array<i64: 2, 1>, scalar_prefetch = 0 : i64, scratch_operands = 0 : i64, tpu.core_type = #tpu.core_type<tc>, window_params = [{transform_indices = @transform_0, window_bounds = array<i64: 1, 8, 256>}, {transform_indices = @transform_1, window_bounds = array<i64: 1, 4, 256>}, {transform_indices = @transform_2, window_bounds = array<i64: 1, 1, 256>}, {transform_indices = @transform_3, window_bounds = array<i64: 1, 1, 256>}, {pipeline_mode = #tpu.pipeline_mode<synchronous>, transform_indices = @transform_4, window_bounds = array<i64: 12, 8>}, {pipeline_mode = #tpu.pipeline_mode<synchronous>, transform_indices = @transform_5, window_bounds = array<i64: 12, 1>}, {pipeline_mode = #tpu.pipeline_mode<synchronous>, transform_indices = @transform_6, window_bounds = array<i64: 12, 12>}, {pipeline_mode = #tpu.pipeline_mode<synchronous>, transform_indices = @transform_7, window_bounds = array<i64: 12, 1>}, {pipeline_mode = #tpu.pipeline_mode<synchronous>, transform_indices = @transform_8, window_bounds = array<i64: 24, 12>}, {pipeline_mode = #tpu.pipeline_mode<synchronous>, transform_indices = @transform_9, window_bounds = array<i64: 24, 1>}, {transform_indices = @transform_10, window_bounds = array<i64: 1, 4, 256>}]} {
    %c0 = arith.constant 0 : index
    %c0_0 = arith.constant 0 : index
    %c0_1 = arith.constant 0 : index
    %0 = vector.load %arg2[%c0, %c0_0, %c0_1] : memref<1x8x256xf32, #tpu.memory_space<vmem>>, vector<1x8x256xf32>
    %1 = vector.shape_cast %0 : vector<1x8x256xf32> to vector<8x256xf32>
    %cst = arith.constant 0.000000e+00 : f32
    %2 = vector.broadcast %cst : f32 to vector<8x256xf32>
    %3 = arith.maximumf %1, %2 : vector<8x256xf32>
    %c0_2 = arith.constant 0 : index
    %c0_3 = arith.constant 0 : index
    %4 = vector.load %arg6[%c0_2, %c0_3] : memref<12x8xf32, #tpu.memory_space<vmem>>, vector<12x8xf32>
    %cst_4 = arith.constant dense<0.000000e+00> : vector<12x256xf32>
    %5 = tpu.matmul %4, %3, %cst_4 {dimension_numbers = #tpu.dot_dimension_numbers<[1], [0], [0], [1], [0, 0, 1, 1], [], []>} : vector<12x8xf32>, vector<8x256xf32>, vector<12x256xf32> -> vector<12x256xf32>
    %c0_5 = arith.constant 0 : index
    %c0_6 = arith.constant 0 : index
    %6 = vector.load %arg7[%c0_5, %c0_6] : memref<12x1xf32, #tpu.memory_space<vmem>>, vector<12x1xf32>
    %7 = vector.broadcast %6 : vector<12x1xf32> to vector<12x256xf32>
    %8 = arith.addf %5, %7 : vector<12x256xf32>
    %cst_7 = arith.constant 0.000000e+00 : f32
    %9 = vector.broadcast %cst_7 : f32 to vector<12x256xf32>
    %10 = arith.maximumf %8, %9 : vector<12x256xf32>
    %c0_8 = arith.constant 0 : index
    %c0_9 = arith.constant 0 : index
    %11 = vector.load %arg8[%c0_8, %c0_9] : memref<12x12xf32, #tpu.memory_space<vmem>>, vector<12x12xf32>
    %cst_10 = arith.constant dense<0.000000e+00> : vector<12x256xf32>
    %12 = tpu.matmul %11, %10, %cst_10 {dimension_numbers = #tpu.dot_dimension_numbers<[1], [0], [0], [1], [0, 0, 1, 1], [], []>} : vector<12x12xf32>, vector<12x256xf32>, vector<12x256xf32> -> vector<12x256xf32>
    %c0_11 = arith.constant 0 : index
    %c0_12 = arith.constant 0 : index
    %13 = vector.load %arg9[%c0_11, %c0_12] : memref<12x1xf32, #tpu.memory_space<vmem>>, vector<12x1xf32>
    %14 = vector.broadcast %13 : vector<12x1xf32> to vector<12x256xf32>
    %15 = arith.addf %12, %14 : vector<12x256xf32>
    %cst_13 = arith.constant 0.000000e+00 : f32
    %16 = vector.broadcast %cst_13 : f32 to vector<12x256xf32>
    %17 = arith.maximumf %15, %16 : vector<12x256xf32>
    %c0_14 = arith.constant 0 : index
    %c0_15 = arith.constant 0 : index
    %18 = vector.load %arg10[%c0_14, %c0_15] : memref<24x12xf32, #tpu.memory_space<vmem>>, vector<24x12xf32>
    %cst_16 = arith.constant dense<0.000000e+00> : vector<24x256xf32>
    %19 = tpu.matmul %18, %17, %cst_16 {dimension_numbers = #tpu.dot_dimension_numbers<[1], [0], [0], [1], [0, 0, 1, 1], [], []>} : vector<24x12xf32>, vector<12x256xf32>, vector<24x256xf32> -> vector<24x256xf32>
    %c0_17 = arith.constant 0 : index
    %c0_18 = arith.constant 0 : index
    %20 = vector.load %arg11[%c0_17, %c0_18] : memref<24x1xf32, #tpu.memory_space<vmem>>, vector<24x1xf32>
    %21 = vector.broadcast %20 : vector<24x1xf32> to vector<24x256xf32>
    %22 = arith.addf %19, %21 : vector<24x256xf32>
    %23 = arith.negf %22 : vector<24x256xf32>
    %24 = math.exp %23 : vector<24x256xf32>
    %cst_19 = arith.constant 1.000000e+00 : f32
    %25 = vector.broadcast %cst_19 : f32 to vector<24x256xf32>
    %26 = arith.addf %25, %24 : vector<24x256xf32>
    %27 = arith.divf %25, %26 : vector<24x256xf32>
    %c0_20 = arith.constant 0 : index
    %c0_21 = arith.constant 0 : index
    %c0_22 = arith.constant 0 : index
    %28 = vector.load %arg3[%c0_20, %c0_21, %c0_22] : memref<1x4x256xf32, #tpu.memory_space<vmem>>, vector<1x4x256xf32>
    %29 = vector.shape_cast %28 : vector<1x4x256xf32> to vector<4x256xf32>
    %30 = vector.extract_strided_slice %27 {offsets = [0, 0], sizes = [4, 256], strides = [1, 1]} : vector<24x256xf32> to vector<4x256xf32>
    %31 = arith.mulf %29, %30 : vector<4x256xf32>
    %c0_23 = arith.constant 0 : index
    %c0_24 = arith.constant 0 : index
    %c0_25 = arith.constant 0 : index
    %32 = vector.load %arg4[%c0_23, %c0_24, %c0_25] : memref<1x1x256xf32, #tpu.memory_space<vmem>>, vector<1x1x256xf32>
    %33 = vector.shape_cast %32 : vector<1x1x256xf32> to vector<1x256xf32>
    %34 = vector.extract_strided_slice %27 {offsets = [8, 0], sizes = [4, 256], strides = [1, 1]} : vector<24x256xf32> to vector<4x256xf32>
    %35 = vector.broadcast %33 : vector<1x256xf32> to vector<4x256xf32>
    %36 = arith.mulf %35, %34 : vector<4x256xf32>
    %37 = arith.addf %31, %36 : vector<4x256xf32>
    %c0_26 = arith.constant 0 : index
    %c0_27 = arith.constant 0 : index
    %c0_28 = arith.constant 0 : index
    %38 = vector.load %arg5[%c0_26, %c0_27, %c0_28] : memref<1x1x256xf32, #tpu.memory_space<vmem>>, vector<1x1x256xf32>
    %39 = vector.shape_cast %38 : vector<1x1x256xf32> to vector<1x256xf32>
    %40 = vector.extract_strided_slice %27 {offsets = [16, 0], sizes = [4, 256], strides = [1, 1]} : vector<24x256xf32> to vector<4x256xf32>
    %41 = vector.broadcast %39 : vector<1x256xf32> to vector<4x256xf32>
    %42 = arith.mulf %41, %40 : vector<4x256xf32>
    %43 = arith.addf %37, %42 : vector<4x256xf32>
    %c0_29 = arith.constant 0 : index
    %c0_30 = arith.constant 0 : index
    %c0_31 = arith.constant 0 : index
    %44 = vector.load %arg12[%c0_29, %c0_30, %c0_31] : memref<1x4x256xf32, #tpu.memory_space<vmem>>, vector<1x4x256xf32>
    %45 = vector.shape_cast %44 : vector<1x4x256xf32> to vector<4x256xf32>
    %46 = vector.shape_cast %43 : vector<4x256xf32> to vector<1x4x256xf32>
    tpu.vector_store %arg12[%c0_29, %c0_30, %c0_31], %46 {strides = array<i32>} : memref<1x4x256xf32, #tpu.memory_space<vmem>>, vector<1x4x256xf32>,
    return
  }
  func.func @transform_0(%arg0: i32, %arg1: i32) -> (i32, i32, i32) {
    %c0_i32 = arith.constant 0 : i32
    %c0_i32_0 = arith.constant 0 : i32
    return %arg0, %c0_i32, %arg1 : i32, i32, i32
  }
  func.func @transform_1(%arg0: i32, %arg1: i32) -> (i32, i32, i32) {
    %c0_i32 = arith.constant 0 : i32
    %c0_i32_0 = arith.constant 0 : i32
    return %arg0, %c0_i32, %arg1 : i32, i32, i32
  }
  func.func @transform_2(%arg0: i32, %arg1: i32) -> (i32, i32, i32) {
    %c0_i32 = arith.constant 0 : i32
    %c0_i32_0 = arith.constant 0 : i32
    return %arg0, %c0_i32, %arg1 : i32, i32, i32
  }
  func.func @transform_3(%arg0: i32, %arg1: i32) -> (i32, i32, i32) {
    %c0_i32 = arith.constant 0 : i32
    %c0_i32_0 = arith.constant 0 : i32
    return %arg0, %c0_i32, %arg1 : i32, i32, i32
  }
  func.func @transform_4(%arg0: i32, %arg1: i32) -> (i32, i32) {
    %c0_i32 = arith.constant 0 : i32
    %c0_i32_0 = arith.constant 0 : i32
    %c0_i32_1 = arith.constant 0 : i32
    return %c0_i32, %c0_i32_0 : i32, i32
  }
  func.func @transform_5(%arg0: i32, %arg1: i32) -> (i32, i32) {
    %c0_i32 = arith.constant 0 : i32
    %c0_i32_0 = arith.constant 0 : i32
    %c0_i32_1 = arith.constant 0 : i32
    return %c0_i32, %c0_i32_0 : i32, i32
  }
  func.func @transform_6(%arg0: i32, %arg1: i32) -> (i32, i32) {
    %c0_i32 = arith.constant 0 : i32
    %c0_i32_0 = arith.constant 0 : i32
    %c0_i32_1 = arith.constant 0 : i32
    return %c0_i32, %c0_i32_0 : i32, i32
  }
  func.func @transform_7(%arg0: i32, %arg1: i32) -> (i32, i32) {
    %c0_i32 = arith.constant 0 : i32
    %c0_i32_0 = arith.constant 0 : i32
    %c0_i32_1 = arith.constant 0 : i32
    return %c0_i32, %c0_i32_0 : i32, i32
  }
  func.func @transform_8(%arg0: i32, %arg1: i32) -> (i32, i32) {
    %c0_i32 = arith.constant 0 : i32
    %c0_i32_0 = arith.constant 0 : i32
    %c0_i32_1 = arith.constant 0 : i32
    return %c0_i32, %c0_i32_0 : i32, i32
  }
  func.func @transform_9(%arg0: i32, %arg1: i32) -> (i32, i32) {
    %c0_i32 = arith.constant 0 : i32
    %c0_i32_0 = arith.constant 0 : i32
    %c0_i32_1 = arith.constant 0 : i32
    return %c0_i32, %c0_i32_0 : i32, i32
  }
  func.func @transform_10(%arg0: i32, %arg1: i32) -> (i32, i32, i32) {
    %c0_i32 = arith.constant 0 : i32
    %c0_i32_0 = arith.constant 0 : i32
    return %arg0, %c0_i32, %arg1 : i32, i32, i32
  }
}

</mosaic_0001>

<llo_original>
// kernel: tpu_custom_call.1
$region0: #{tpu_custom_call.1}
  #allocation0 [shape = 'u32[]', space=smem, size = 0x4, offset = 0x4, fixed_abs, tag = 'smem constant byte address 0x4 - core index']
  #allocation1 [shape = 'u32[144,128]{1,0:T(1,128)}', space=vmem, size = 0x12000, scoped, tag = 'internal scratch']
  %s0 = inlined_call_operand.vmem [shape: f32[2,8,256], index: 0, kind: input, shape index: {}]
  %s1 = inlined_call_operand.vmem [shape: f32[2,4,256], index: 1, kind: input, shape index: {}]
  %s2 = inlined_call_operand.vmem [shape: f32[2,1,256], index: 2, kind: input, shape index: {}]
  %s3 = inlined_call_operand.vmem [shape: f32[2,1,256], index: 3, kind: input, shape index: {}]
  %s4 = inlined_call_operand.vmem [shape: f32[12,8], index: 4, kind: input, shape index: {}]
  %s5 = inlined_call_operand.vmem [shape: f32[12,1], index: 5, kind: input, shape index: {}]
  %s6 = inlined_call_operand.vmem [shape: f32[12,12], index: 6, kind: input, shape index: {}]
  %s7 = inlined_call_operand.vmem [shape: f32[12,1], index: 7, kind: input, shape index: {}]
  %s8 = inlined_call_operand.vmem [shape: f32[24,12], index: 8, kind: input, shape index: {}]
  %s9 = inlined_call_operand.vmem [shape: f32[24,1], index: 9, kind: input, shape index: {}]
  %s10 = inlined_call_operand.hbm [shape: f32[2,4,256], index: 10, kind: output, shape index: {}]
  %s11 = sld [smem:[#allocation0]]
  $region73: #{tpu_custom_call.1} parent=0
    _
  %s13 = ssub.s32 1, %s11
  %s14 = scalar_select 0, %s13, %s11
  $region1: #{tpu_custom_call.1} parent=0
    #allocation2 [shape = 'u8[8192]{0}', space=vmem, size = 0x2000, scoped, tag = 'output window, operand 0']
    #allocation3 [shape = 's32[2]{0}', space=sflag, size = 0x8, scoped, tag = 'scoped memory for tpu_custom_call.1']
    %15 = vsyncpa [#allocation3], 0
    %s16 = scalar_lea.sflag [#allocation3], 1
    %17 = vsyncpa %s16, 0
    loop: start=0, step=1, limit=4
    $region2: #{tpu_custom_call.1} parent=1 // loop_pre_header
      _
    $region3: #{tpu_custom_call.1} parent=1 // loop_header
      %s19 = sphi 0, %s23
      %p20 = scmp.ge.s32.totalorder %s19, 4
      %s26 = sphi 0, %s38
      %s27 = sphi 0, %s34
      %s28 = sphi 0, %s26
      %s29 = sphi 0, %s27
      %s30 = sphi 0, %s28
      %s31 = sphi 0, %s29
      %s43 = sphi 0, %s45
      %s46 = sphi 0, %s43
      %s47 = sphi 0, %s46
      %s63 = sphi 0, %s47
      %s71 = sphi 0, %s73
      %s74 = sphi 0, %s71
      %s75 = sphi 0, %s74
      %s91 = sphi 0, %s75
      %s99 = sphi 0, %s101
      %s102 = sphi 0, %s99
      %s103 = sphi 0, %s102
      %s119 = sphi 0, %s103
      %s127 = sphi 0, %s129
      %s130 = sphi 0, %s127
      %s131 = sphi 0, %s130
      %s147 = sphi 0, %s131
      %s151 = sphi 0, %s151
      %s153 = sphi 0, %s151
      %s154 = sphi 0, %s153
      %s168 = sphi 0, %s154
      %s172 = sphi 0, %s172
      %s174 = sphi 0, %s172
      %s175 = sphi 0, %s174
      %s189 = sphi 0, %s175
      %s193 = sphi 0, %s193
      %s195 = sphi 0, %s193
      %s196 = sphi 0, %s195
      %s210 = sphi 0, %s196
      %s214 = sphi 0, %s214
      %s216 = sphi 0, %s214
      %s217 = sphi 0, %s216
      %s231 = sphi 0, %s217
      %s235 = sphi 0, %s235
      %s237 = sphi 0, %s235
      %s238 = sphi 0, %s237
      %s252 = sphi 0, %s238
      %s256 = sphi 0, %s256
      %s258 = sphi 0, %s256
      %s259 = sphi 0, %s258
      %s273 = sphi 0, %s259
      %s281 = sphi 0, %s283
      %s284 = sphi 0, %s281
      %s285 = sphi 0, %s284
      %s301 = sphi 0, %s285
    $region4: #{tpu_custom_call.1} parent=1 // loop_header_branch
      %22 = sbr.rel (%p20) target = $region8
    $region5: #{tpu_custom_call.1} parent=1 // loop_body
      %s24 = ssub.s32 %s19, 1
      %s25 = ssub.s32 %s19, 2
      %s32 = sadd.s32 1, %s27
      %p33 = scmp.ge.s32.totalorder %s32, 1
      %s34 = scalar_select %p33, 0, %s32
      %s35 = sadd.s32 1, %s26
      %s36 = scalar_select %p33, %s35, %s26
      %p37 = scmp.ge.s32.totalorder %s36, 2
      %s38 = scalar_select %p37, 0, %s36
      %s39 = ssub.s32 %s26, %s38
      %s40 = ssub.s32 %s27, %s34
      %s41 = sor.u32 %s39, %s40
      %p42 = scmp.eq.s32.totalorder %s41, 0
      %s44 = sadd.s32 %s43, 1
      %s45 = scalar_select %p42, %s43, %s44
      %p48 = pneg %p42
      %p49 = scmp.eq.s32.totalorder %s19, 1
      %p50 = por %p48, %p49
      %p51 = scmp.ne.s32.totalorder %s43, %s46
      %p52 = scmp.eq.s32.totalorder %s19, 0
      %p53 = por %p51, %p52
      %p54 = scmp.ne.s32.totalorder %s43, %s46
      %p55 = scmp.eq.s32.totalorder %s24, 1
      %p56 = por %p54, %p55
      %p57 = scmp.ne.s32.totalorder %s46, %s47
      %p58 = scmp.eq.s32.totalorder %s24, 0
      %p59 = por %p57, %p58
      %p60 = scmp.ne.s32.totalorder %s46, %s47
      %p61 = scmp.eq.s32.totalorder %s25, 1
      %p62 = por %p60, %p61
      %p64 = scmp.ne.s32.totalorder %s47, %s63
      %p65 = scmp.eq.s32.totalorder %s25, 0
      %p66 = por %p64, %p65
      %s67 = ssub.s32 %s26, %s38
      %s68 = ssub.s32 %s27, %s34
      %s69 = sor.u32 %s67, %s68
      %p70 = scmp.eq.s32.totalorder %s69, 0
      %s72 = sadd.s32 %s71, 1
      %s73 = scalar_select %p70, %s71, %s72
      %p76 = pneg %p70
      %p77 = scmp.eq.s32.totalorder %s19, 1
      %p78 = por %p76, %p77
      %p79 = scmp.ne.s32.totalorder %s71, %s74
      %p80 = scmp.eq.s32.totalorder %s19, 0
      %p81 = por %p79, %p80
      %p82 = scmp.ne.s32.totalorder %s71, %s74
      %p83 = scmp.eq.s32.totalorder %s24, 1
      %p84 = por %p82, %p83
      %p85 = scmp.ne.s32.totalorder %s74, %s75
      %p86 = scmp.eq.s32.totalorder %s24, 0
      %p87 = por %p85, %p86
      %p88 = scmp.ne.s32.totalorder %s74, %s75
      %p89 = scmp.eq.s32.totalorder %s25, 1
      %p90 = por %p88, %p89
      %p92 = scmp.ne.s32.totalorder %s75, %s91
      %p93 = scmp.eq.s32.totalorder %s25, 0
      %p94 = por %p92, %p93
      %s95 = ssub.s32 %s26, %s38
      %s96 = ssub.s32 %s27, %s34
      %s97 = sor.u32 %s95, %s96
      %p98 = scmp.eq.s32.totalorder %s97, 0
      %s100 = sadd.s32 %s99, 1
      %s101 = scalar_select %p98, %s99, %s100
      %p104 = pneg %p98
      %p105 = scmp.eq.s32.totalorder %s19, 1
      %p106 = por %p104, %p105
      %p107 = scmp.ne.s32.totalorder %s99, %s102
      %p108 = scmp.eq.s32.totalorder %s19, 0
      %p109 = por %p107, %p108
      %p110 = scmp.ne.s32.totalorder %s99, %s102
      %p111 = scmp.eq.s32.totalorder %s24, 1
      %p112 = por %p110, %p111
      %p113 = scmp.ne.s32.totalorder %s102, %s103
      %p114 = scmp.eq.s32.totalorder %s24, 0
      %p115 = por %p113, %p114
      %p116 = scmp.ne.s32.totalorder %s102, %s103
      %p117 = scmp.eq.s32.totalorder %s25, 1
      %p118 = por %p116, %p117
      %p120 = scmp.ne.s32.totalorder %s103, %s119
      %p121 = scmp.eq.s32.totalorder %s25, 0
      %p122 = por %p120, %p121
      %s123 = ssub.s32 %s26, %s38
      %s124 = ssub.s32 %s27, %s34
      %s125 = sor.u32 %s123, %s124
      %p126 = scmp.eq.s32.totalorder %s125, 0
      %s128 = sadd.s32 %s127, 1
      %s129 = scalar_select %p126, %s127, %s128
      %p132 = pneg %p126
      %p133 = scmp.eq.s32.totalorder %s19, 1
      %p134 = por %p132, %p133
      %p135 = scmp.ne.s32.totalorder %s127, %s130
      %p136 = scmp.eq.s32.totalorder %s19, 0
      %p137 = por %p135, %p136
      %p138 = scmp.ne.s32.totalorder %s127, %s130
      %p139 = scmp.eq.s32.totalorder %s24, 1
      %p140 = por %p138, %p139
      %p141 = scmp.ne.s32.totalorder %s130, %s131
      %p142 = scmp.eq.s32.totalorder %s24, 0
      %p143 = por %p141, %p142
      %p144 = scmp.ne.s32.totalorder %s130, %s131
      %p145 = scmp.eq.s32.totalorder %s25, 1
      %p146 = por %p144, %p145
      %p148 = scmp.ne.s32.totalorder %s131, %s147
      %p149 = scmp.eq.s32.totalorder %s25, 0
      %p150 = por %p148, %p149
      %s152 = sadd.s32 %s151, 1
      %p155 = scmp.eq.s32.totalorder %s19, 1
      %p156 = scmp.ne.s32.totalorder %s151, %s153
      %p157 = scmp.eq.s32.totalorder %s19, 0
      %p158 = por %p156, %p157
      %p159 = scmp.ne.s32.totalorder %s151, %s153
      %p160 = scmp.eq.s32.totalorder %s24, 1
      %p161 = por %p159, %p160
      %p162 = scmp.ne.s32.totalorder %s153, %s154
      %p163 = scmp.eq.s32.totalorder %s24, 0
      %p164 = por %p162, %p163
      %p165 = scmp.ne.s32.totalorder %s153, %s154
      %p166 = scmp.eq.s32.totalorder %s25, 1
      %p167 = por %p165, %p166
      %p169 = scmp.ne.s32.totalorder %s154, %s168
      %p170 = scmp.eq.s32.totalorder %s25, 0
      %p171 = por %p169, %p170
      %s173 = sadd.s32 %s172, 1
      %p176 = scmp.eq.s32.totalorder %s19, 1
      %p177 = scmp.ne.s32.totalorder %s172, %s174
      %p178 = scmp.eq.s32.totalorder %s19, 0
      %p179 = por %p177, %p178
      %p180 = scmp.ne.s32.totalorder %s172, %s174
      %p181 = scmp.eq.s32.totalorder %s24, 1
      %p182 = por %p180, %p181
      %p183 = scmp.ne.s32.totalorder %s174, %s175
      %p184 = scmp.eq.s32.totalorder %s24, 0
      %p185 = por %p183, %p184
      %p186 = scmp.ne.s32.totalorder %s174, %s175
      %p187 = scmp.eq.s32.totalorder %s25, 1
      %p188 = por %p186, %p187
      %p190 = scmp.ne.s32.totalorder %s175, %s189
      %p191 = scmp.eq.s32.totalorder %s25, 0
      %p192 = por %p190, %p191
      %s194 = sadd.s32 %s193, 1
      %p197 = scmp.eq.s32.totalorder %s19, 1
      %p198 = scmp.ne.s32.totalorder %s193, %s195
      %p199 = scmp.eq.s32.totalorder %s19, 0
      %p200 = por %p198, %p199
      %p201 = scmp.ne.s32.totalorder %s193, %s195
      %p202 = scmp.eq.s32.totalorder %s24, 1
      %p203 = por %p201, %p202
      %p204 = scmp.ne.s32.totalorder %s195, %s196
      %p205 = scmp.eq.s32.totalorder %s24, 0
      %p206 = por %p204, %p205
      %p207 = scmp.ne.s32.totalorder %s195, %s196
      %p208 = scmp.eq.s32.totalorder %s25, 1
      %p209 = por %p207, %p208
      %p211 = scmp.ne.s32.totalorder %s196, %s210
      %p212 = scmp.eq.s32.totalorder %s25, 0
      %p213 = por %p211, %p212
      %s215 = sadd.s32 %s214, 1
      %p218 = scmp.eq.s32.totalorder %s19, 1
      %p219 = scmp.ne.s32.totalorder %s214, %s216
      %p220 = scmp.eq.s32.totalorder %s19, 0
      %p221 = por %p219, %p220
      %p222 = scmp.ne.s32.totalorder %s214, %s216
      %p223 = scmp.eq.s32.totalorder %s24, 1
      %p224 = por %p222, %p223
      %p225 = scmp.ne.s32.totalorder %s216, %s217
      %p226 = scmp.eq.s32.totalorder %s24, 0
      %p227 = por %p225, %p226
      %p228 = scmp.ne.s32.totalorder %s216, %s217
      %p229 = scmp.eq.s32.totalorder %s25, 1
      %p230 = por %p228, %p229
      %p232 = scmp.ne.s32.totalorder %s217, %s231
      %p233 = scmp.eq.s32.totalorder %s25, 0
      %p234 = por %p232, %p233
      %s236 = sadd.s32 %s235, 1
      %p239 = scmp.eq.s32.totalorder %s19, 1
      %p240 = scmp.ne.s32.totalorder %s235, %s237
      %p241 = scmp.eq.s32.totalorder %s19, 0
      %p242 = por %p240, %p241
      %p243 = scmp.ne.s32.totalorder %s235, %s237
      %p244 = scmp.eq.s32.totalorder %s24, 1
      %p245 = por %p243, %p244
      %p246 = scmp.ne.s32.totalorder %s237, %s238
      %p247 = scmp.eq.s32.totalorder %s24, 0
      %p248 = por %p246, %p247
      %p249 = scmp.ne.s32.totalorder %s237, %s238
      %p250 = scmp.eq.s32.totalorder %s25, 1
      %p251 = por %p249, %p250
      %p253 = scmp.ne.s32.totalorder %s238, %s252
      %p254 = scmp.eq.s32.totalorder %s25, 0
      %p255 = por %p253, %p254
      %s257 = sadd.s32 %s256, 1
      %p260 = scmp.eq.s32.totalorder %s19, 1
      %p261 = scmp.ne.s32.totalorder %s256, %s258
      %p262 = scmp.eq.s32.totalorder %s19, 0
      %p263 = por %p261, %p262
      %p264 = scmp.ne.s32.totalorder %s256, %s258
      %p265 = scmp.eq.s32.totalorder %s24, 1
      %p266 = por %p264, %p265
      %p267 = scmp.ne.s32.totalorder %s258, %s259
      %p268 = scmp.eq.s32.totalorder %s24, 0
      %p269 = por %p267, %p268
      %p270 = scmp.ne.s32.totalorder %s258, %s259
      %p271 = scmp.eq.s32.totalorder %s25, 1
      %p272 = por %p270, %p271
      %p274 = scmp.ne.s32.totalorder %s259, %s273
      %p275 = scmp.eq.s32.totalorder %s25, 0
      %p276 = por %p274, %p275
      %s277 = ssub.s32 %s26, %s38
      %s278 = ssub.s32 %s27, %s34
      %s279 = sor.u32 %s277, %s278
      %p280 = scmp.eq.s32.totalorder %s279, 0
      %s282 = sadd.s32 %s281, 1
      %s283 = scalar_select %p280, %s281, %s282
      %p286 = pneg %p280
      %p287 = scmp.eq.s32.totalorder %s19, 1
      %p288 = por %p286, %p287
      %p289 = scmp.ne.s32.totalorder %s281, %s284
      %p290 = scmp.eq.s32.totalorder %s19, 0
      %p291 = por %p289, %p290
      %p292 = scmp.ne.s32.totalorder %s281, %s284
      %p293 = scmp.eq.s32.totalorder %s24, 1
      %p294 = por %p292, %p293
      %p295 = scmp.ne.s32.totalorder %s284, %s285
      %p296 = scmp.eq.s32.totalorder %s24, 0
      %p297 = por %p295, %p296
      %p298 = scmp.ne.s32.totalorder %s284, %s285
      %p299 = scmp.eq.s32.totalorder %s25, 1
      %p300 = por %p298, %p299
      %p302 = scmp.ne.s32.totalorder %s285, %s301
      %p303 = scmp.eq.s32.totalorder %s25, 0
      %p304 = por %p302, %p303
      %p305 = scmp.le.s32.totalorder 1, %s19
      %p306 = scmp.lt.s32.totalorder %s19, 3
      %p307 = pnand %p305, %p306
      %p308 = pneg %p307
      // Predicated region
      $region9: #{tpu_custom_call.1} parent=5 // pred_check
        _
      $region10: #{tpu_custom_call.1} parent=5 // pred_check_branch
        %310 = sbr.rel (%p307) target = $region12
      $region11: #{tpu_custom_call.1} parent=5 // pred_region
        %s311 = ssub.s32 %s19, 1
        // Predicated region
        $region13: #{tpu_custom_call.1} parent=11 // pred_check
          %p312 = pneg %p164
        $region14: #{tpu_custom_call.1} parent=11 // pred_check_branch
          %314 = sbr.rel (%p312) target = $region16
        $region15: #{tpu_custom_call.1} parent=11 // pred_region
          _
        $region16: #{tpu_custom_call.1} parent=11 // pred_fallthru
          _
        // Predicated region
        $region17: #{tpu_custom_call.1} parent=11 // pred_check
          %p315 = pneg %p185
        $region18: #{tpu_custom_call.1} parent=11 // pred_check_branch
          %317 = sbr.rel (%p315) target = $region20
        $region19: #{tpu_custom_call.1} parent=11 // pred_region
          _
        $region20: #{tpu_custom_call.1} parent=11 // pred_fallthru
          _
        // Predicated region
        $region21: #{tpu_custom_call.1} parent=11 // pred_check
          %p318 = pneg %p206
        $region22: #{tpu_custom_call.1} parent=11 // pred_check_branch
          %320 = sbr.rel (%p318) target = $region24
        $region23: #{tpu_custom_call.1} parent=11 // pred_region
          _
        $region24: #{tpu_custom_call.1} parent=11 // pred_fallthru
          _
        // Predicated region
        $region25: #{tpu_custom_call.1} parent=11 // pred_check
          %p321 = pneg %p227
        $region26: #{tpu_custom_call.1} parent=11 // pred_check_branch
          %323 = sbr.rel (%p321) target = $region28
        $region27: #{tpu_custom_call.1} parent=11 // pred_region
          _
        $region28: #{tpu_custom_call.1} parent=11 // pred_fallthru
          _
        // Predicated region
        $region29: #{tpu_custom_call.1} parent=11 // pred_check
          %p324 = pneg %p248
        $region30: #{tpu_custom_call.1} parent=11 // pred_check_branch
          %326 = sbr.rel (%p324) target = $region32
        $region31: #{tpu_custom_call.1} parent=11 // pred_region
          _
        $region32: #{tpu_custom_call.1} parent=11 // pred_fallthru
          _
        // Predicated region
        $region33: #{tpu_custom_call.1} parent=11 // pred_check
          %p327 = pneg %p269
        $region34: #{tpu_custom_call.1} parent=11 // pred_check_branch
          %329 = sbr.rel (%p327) target = $region36
        $region35: #{tpu_custom_call.1} parent=11 // pred_region
          _
        $region36: #{tpu_custom_call.1} parent=11 // pred_fallthru
          _
      $region12: #{tpu_custom_call.1} parent=5 // pred_fallthru
        _
      %p330 = scmp.lt.s32.totalorder %s19, 2
      // Predicated region
      $region37: #{tpu_custom_call.1} parent=5 // pred_check
        %p331 = pneg %p330
      $region38: #{tpu_custom_call.1} parent=5 // pred_check_branch
        %333 = sbr.rel (%p331) target = $region40
      $region39: #{tpu_custom_call.1} parent=5 // pred_region
        // Predicated region
        $region41: #{tpu_custom_call.1} parent=39 // pred_check
          %p334 = pneg %p53
        $region42: #{tpu_custom_call.1} parent=39 // pred_check_branch
          %336 = sbr.rel (%p334) target = $region44
        $region43: #{tpu_custom_call.1} parent=39 // pred_region
          %s337 = smul.u32 2, %s27
          %p338 = scmp.lt.s32.totalorder %s26, 1
          %s339 = scalar_select %p338, %s26, 1
          %p340 = scmp.lt.s32.totalorder %s337, 1
          %s341 = scalar_select %p340, %s337, 1
          %s342 = smul.addr %s339, 2
          %s343 = sadd.s32 %s341, %s342
          %s344 = smul.addr %s343, 8
          %s345 = scalar_lea.vmem %s0, %s344
          %s346 = smul.u32 2, %s27
        $region44: #{tpu_custom_call.1} parent=39 // pred_fallthru
          _
        // Predicated region
        $region45: #{tpu_custom_call.1} parent=39 // pred_check
          %p347 = pneg %p81
        $region46: #{tpu_custom_call.1} parent=39 // pred_check_branch
          %349 = sbr.rel (%p347) target = $region48
        $region47: #{tpu_custom_call.1} parent=39 // pred_region
          %s350 = smul.u32 2, %s27
          %p351 = scmp.lt.s32.totalorder %s26, 1
          %s352 = scalar_select %p351, %s26, 1
          %p353 = scmp.lt.s32.totalorder %s350, 1
          %s354 = scalar_select %p353, %s350, 1
          %s355 = smul.addr %s352, 2
          %s356 = sadd.s32 %s354, %s355
          %s357 = smul.addr %s356, 4
          %s358 = scalar_lea.vmem %s1, %s357
          %s359 = smul.u32 2, %s27
        $region48: #{tpu_custom_call.1} parent=39 // pred_fallthru
          _
        // Predicated region
        $region49: #{tpu_custom_call.1} parent=39 // pred_check
          %p360 = pneg %p109
        $region50: #{tpu_custom_call.1} parent=39 // pred_check_branch
          %362 = sbr.rel (%p360) target = $region52
        $region51: #{tpu_custom_call.1} parent=39 // pred_region
          %s363 = smul.u32 2, %s27
          %p364 = scmp.lt.s32.totalorder %s26, 1
          %s365 = scalar_select %p364, %s26, 1
          %p366 = scmp.lt.s32.totalorder %s363, 1
          %s367 = scalar_select %p366, %s363, 1
          %s368 = smul.addr %s365, 2
          %s369 = sadd.s32 %s367, %s368
          %s370 = scalar_lea.vmem %s2, %s369
          %s371 = smul.u32 2, %s27
        $region52: #{tpu_custom_call.1} parent=39 // pred_fallthru
          _
        // Predicated region
        $region53: #{tpu_custom_call.1} parent=39 // pred_check
          %p372 = pneg %p137
        $region54: #{tpu_custom_call.1} parent=39 // pred_check_branch
          %374 = sbr.rel (%p372) target = $region56
        $region55: #{tpu_custom_call.1} parent=39 // pred_region
          %s375 = smul.u32 2, %s27
          %p376 = scmp.lt.s32.totalorder %s26, 1
          %s377 = scalar_select %p376, %s26, 1
          %p378 = scmp.lt.s32.totalorder %s375, 1
          %s379 = scalar_select %p378, %s375, 1
          %s380 = smul.addr %s377, 2
          %s381 = sadd.s32 %s379, %s380
          %s382 = scalar_lea.vmem %s3, %s381
          %s383 = smul.u32 2, %s27
        $region56: #{tpu_custom_call.1} parent=39 // pred_fallthru
          _
      $region40: #{tpu_custom_call.1} parent=5 // pred_fallthru
        _
      %p384 = scmp.le.s32.totalorder 1, %s19
      %p385 = scmp.lt.s32.totalorder %s19, 3
      %p386 = pnand %p384, %p385
      %p387 = pneg %p386
      // Predicated region
      $region57: #{tpu_custom_call.1} parent=5 // pred_check
        _
      $region58: #{tpu_custom_call.1} parent=5 // pred_check_branch
        %389 = sbr.rel (%p386) target = $region60
      $region59: #{tpu_custom_call.1} parent=5 // pred_region
        %s390 = ssub.s32 %s19, 1
        %s391 = smul.u32 2, %s29
        %p392 = scmp.lt.s32.totalorder %s28, 1
        %s393 = scalar_select %p392, %s28, 1
        %p394 = scmp.lt.s32.totalorder %s391, 1
        %s395 = scalar_select %p394, %s391, 1
        %s396 = smul.addr %s393, 2
        %s397 = sadd.s32 %s395, %s396
        %s398 = smul.addr %s397, 8
        %s399 = scalar_lea.vmem %s0, %s398
        %p400 = pneg %p59
        %p401 = pneg %p56
        %s402 = smul.u32 2, %s29
        %p403 = scmp.lt.s32.totalorder %s28, 1
        %s404 = scalar_select %p403, %s28, 1
        %p405 = scmp.lt.s32.totalorder %s402, 1
        %s406 = scalar_select %p405, %s402, 1
        %s407 = smul.addr %s404, 2
        %s408 = sadd.s32 %s406, %s407
        %s409 = smul.addr %s408, 4
        %s410 = scalar_lea.vmem %s1, %s409
        %p411 = pneg %p87
        %p412 = pneg %p84
        %s413 = smul.u32 2, %s29
        %p414 = scmp.lt.s32.totalorder %s28, 1
        %s415 = scalar_select %p414, %s28, 1
        %p416 = scmp.lt.s32.totalorder %s413, 1
        %s417 = scalar_select %p416, %s413, 1
        %s418 = smul.addr %s415, 2
        %s419 = sadd.s32 %s417, %s418
        %s420 = scalar_lea.vmem %s2, %s419
        %p421 = pneg %p115
        %p422 = pneg %p112
        %s423 = smul.u32 2, %s29
        %p424 = scmp.lt.s32.totalorder %s28, 1
        %s425 = scalar_select %p424, %s28, 1
        %p426 = scmp.lt.s32.totalorder %s423, 1
        %s427 = scalar_select %p426, %s423, 1
        %s428 = smul.addr %s425, 2
        %s429 = sadd.s32 %s427, %s428
        %s430 = scalar_lea.vmem %s3, %s429
        %p431 = pneg %p143
        %p432 = pneg %p140
        %p433 = pneg %p164
        %p434 = pneg %p161
        %p435 = pneg %p185
        %p436 = pneg %p182
        %p437 = pneg %p206
        %p438 = pneg %p203
        %p439 = pneg %p227
        %p440 = pneg %p224
        %p441 = pneg %p248
        %p442 = pneg %p245
        %p443 = pneg %p269
        %p444 = pneg %p266
        %p445 = pneg %p297
        %p446 = pneg %p294
        %s447 = sand.u32 %s284, 1
        %s448 = scalar_lea.sflag [#allocation3], %s447
        %s449 = sand.u32 %s284, 1
        %s450 = smul.addr %s449, 8
        %s451 = scalar_lea.vmem [#allocation2], %s450
        %s452 = smul.u32 2, %s29
        %p453 = scmp.lt.s32.totalorder %s28, 1
        %s454 = scalar_select %p453, %s28, 1
        %p455 = scmp.lt.s32.totalorder %s452, 1
        %s456 = scalar_select %p455, %s452, 1
        %s457 = smul.addr %s454, 2
        %s458 = sadd.s32 %s456, %s457
        %s459 = smul.addr %s458, 8
        %s460 = scalar_lea.vmem %s0, %s459
        %s461 = smul.u32 2, %s29
        %s462 = smul.u32 2, %s29
        %p463 = scmp.lt.s32.totalorder %s28, 1
        %s464 = scalar_select %p463, %s28, 1
        %p465 = scmp.lt.s32.totalorder %s462, 1
        %s466 = scalar_select %p465, %s462, 1
        %s467 = smul.addr %s464, 2
        %s468 = sadd.s32 %s466, %s467
        %s469 = smul.addr %s468, 4
        %s470 = scalar_lea.vmem %s1, %s469
        %s471 = smul.u32 2, %s29
        %s472 = smul.u32 2, %s29
        %p473 = scmp.lt.s32.totalorder %s28, 1
        %s474 = scalar_select %p473, %s28, 1
        %p475 = scmp.lt.s32.totalorder %s472, 1
        %s476 = scalar_select %p475, %s472, 1
        %s477 = smul.addr %s474, 2
        %s478 = sadd.s32 %s476, %s477
        %s479 = scalar_lea.vmem %s2, %s478
        %s480 = smul.u32 2, %s29
        %s481 = smul.u32 2, %s29
        %p482 = scmp.lt.s32.totalorder %s28, 1
        %s483 = scalar_select %p482, %s28, 1
        %p484 = scmp.lt.s32.totalorder %s481, 1
        %s485 = scalar_select %p484, %s481, 1
        %s486 = smul.addr %s483, 2
        %s487 = sadd.s32 %s485, %s486
        %s488 = scalar_lea.vmem %s3, %s487
        %s489 = smul.u32 2, %s29
        %s490 = smul.u32 2, %s29
        %v491 = vld [vmem:[%s460] sm:$0xff]
        %v492 = vld [vmem:[%s460 + $0x8] sm:$0xff]
        %v493 = vmax.f32 %v491, 0.0
        %v494 = vmax.f32 %v492, 0.0
        %v495 = vld [vmem:[%s4] sm:$0xff]
        %v496 = vld [vmem:[%s4 + $0x8] sm:$0xf]
        %v497 = vld [vmem:[%s5] sm:$0xff]
        %v498 = vld [vmem:[%s5 + $0x8] sm:$0xf]
        %500 = vset.pattern.permute.xlu0 0
        %501 = vperm.xlu0 %500, %v497
        %v502 = vpop.permute.xlu0 %501
        %505 = vset.pattern.permute.xlu0 0
        %506 = vperm.xlu0 %505, %v498
        %v507 = vpop.permute.xlu0 %506
        %vm509 = vcmask 64512
        %v511 = vsel %vm509, %v495, 0
        %v514 = vsel %vm509, %v496, 0
        %516 = vmatprep.subr.mxu0 %v494
        %517 = vmatpush1.msra.mxu0 %v493
        %518 = vmatprep.subr.mxu0 0.0
        %519 = vmatpush1.msra.mxu0 0.0
        %520 = vmatprep.subr.mxu0 0.0
        %521 = vmatpush1.msra.mxu0 0.0
        %522 = vmatprep.subr.mxu0 0.0
        %523 = vmatpush1.msra.mxu0 0.0
        %524 = vmatprep.subr.mxu0 0.0
        %525 = vmatpush1.msra.mxu0 0.0
        %526 = vmatprep.subr.mxu0 0.0
        %527 = vmatpush1.msra.mxu0 0.0
        %528 = vmatprep.subr.mxu0 0.0
        %529 = vmatpush1.msra.mxu0 0.0
        %530 = vmatprep.subr.mxu0 0.0
        %531 = vmatpush1.msra.mxu0 0.0
        %532 = vmatprep.subr.mxu0 0.0
        %533 = vmatpush1.msra.mxu0 0.0
        %534 = vmatprep.subr.mxu0 0.0
        %535 = vmatpush1.msra.mxu0 0.0
        %536 = vmatprep.subr.mxu0 0.0
        %537 = vmatpush1.msra.mxu0 0.0
        %538 = vmatprep.subr.mxu0 0.0
        %539 = vmatpush1.msra.mxu0 0.0
        %540 = vmatprep.subr.mxu0 0.0
        %541 = vmatpush1.msra.mxu0 0.0
        %542 = vmatprep.subr.mxu0 0.0
        %543 = vmatpush1.msra.mxu0 0.0
        %544 = vmatprep.subr.mxu0 0.0
        %545 = vmatpush1.msra.mxu0 0.0
        %546 = vmatprep.subr.mxu0 0.0
        %547 = vmatpush1.msra.mxu0 0.0
        %548 = vmatprep.subr.mxu0 0.0
        %549 = vmatpush1.msra.mxu0 0.0
        %550 = vmatprep.subr.mxu0 0.0
        %551 = vmatpush1.msra.mxu0 0.0
        %552 = vmatprep.subr.mxu0 0.0
        %553 = vmatpush1.msra.mxu0 0.0
        %554 = vmatprep.subr.mxu0 0.0
        %555 = vmatpush1.msra.mxu0 0.0
        %556 = vmatprep.subr.mxu0 0.0
        %557 = vmatpush1.msra.mxu0 0.0
        %558 = vmatprep.subr.mxu0 0.0
        %559 = vmatpush1.msra.mxu0 0.0
        %560 = vmatprep.subr.mxu0 0.0
        %561 = vmatpush1.msra.mxu0 0.0
        %562 = vmatprep.subr.mxu0 0.0
        %563 = vmatpush1.msra.mxu0 0.0
        %564 = vmatprep.subr.mxu0 0.0
        %565 = vmatpush1.msra.mxu0 0.0
        %566 = vmatprep.subr.mxu0 0.0
        %567 = vmatpush1.msra.mxu0 0.0
        %568 = vmatprep.subr.mxu0 0.0
        %569 = vmatpush1.msra.mxu0 0.0
        %570 = vmatprep.subr.mxu0 0.0
        %571 = vmatpush1.msra.mxu0 0.0
        %572 = vmatprep.subr.mxu0 0.0
        %573 = vmatpush1.msra.mxu0 0.0
        %574 = vmatprep.subr.mxu0 0.0
        %575 = vmatpush1.msra.mxu0 0.0
        %576 = vmatprep.subr.mxu0 0.0
        %577 = vmatpush1.msra.mxu0 0.0
        %578 = vmatprep.subr.mxu0 0.0
        %579 = vmatpush1.msra.mxu0 0.0
        %580 = vmatprep.mubr.f32.mxu0 0.0
        %581 = vmatmul.mubr.f32.gmra.mrb[0].mxu0 %v511
        %v582 = vpop.f32.mrb[0].mxu0
        %v583 = vadd.f32 %v502, %v582
        %v584 = vpop.f32.mrb[0].mxu0
        %v585 = vadd.f32 %v502, %v584
        %586 = vmatprep.mubr.f32.mxu0 0.0
        %587 = vmatmul.mubr.f32.gmra.mrb[0].mxu0 %v514
        %v588 = vpop.f32.mrb[0].mxu0
        %v589 = vadd.f32 %v507, %v588
        %v590 = vpop.f32.mrb[0].mxu0
        %v591 = vadd.f32 %v507, %v590
        %592 = vdwg.mxu0
        %v593 = vmax.f32 %v583, 0.0
        %v594 = vmax.f32 %v585, 0.0
        %v595 = vmax.f32 %v589, 0.0
        %v596 = vmax.f32 %v591, 0.0
        %v597 = vld [vmem:[%s6] sm:$0xff]
        %v598 = vld [vmem:[%s6 + $0x8] sm:$0xf]
        %v599 = vld [vmem:[%s7] sm:$0xff]
        %v600 = vld [vmem:[%s7 + $0x8] sm:$0xf]
        %602 = vset.pattern.permute.xlu0 0
        %603 = vperm.xlu0 %602, %v599
        %v604 = vpop.permute.xlu0 %603
        %607 = vset.pattern.permute.xlu0 0
        %608 = vperm.xlu0 %607, %v600
        %v609 = vpop.permute.xlu0 %608
        %vm611 = vcmask 97280
        %v613 = vsel %vm611, %v597, 0
        %v616 = vsel %vm611, %v598, 0
        %vm618 = vcmask 1043456
        %v620 = vsel %vm618, %v595, 0
        %v623 = vsel %vm618, %v596, 0
        %625 = vmatprep.subr.mxu0 %v594
        %626 = vmatpush1.msra.mxu0 %v593
        %627 = vmatprep.subr.mxu0 %v623
        %628 = vmatpush1.msra.mxu0 %v620
        %629 = vmatprep.subr.mxu0 0.0
        %630 = vmatpush1.msra.mxu0 0.0
        %631 = vmatprep.subr.mxu0 0.0
        %632 = vmatpush1.msra.mxu0 0.0
        %633 = vmatprep.subr.mxu0 0.0
        %634 = vmatpush1.msra.mxu0 0.0
        %635 = vmatprep.subr.mxu0 0.0
        %636 = vmatpush1.msra.mxu0 0.0
        %637 = vmatprep.subr.mxu0 0.0
        %638 = vmatpush1.msra.mxu0 0.0
        %639 = vmatprep.subr.mxu0 0.0
        %640 = vmatpush1.msra.mxu0 0.0
        %641 = vmatprep.subr.mxu0 0.0
        %642 = vmatpush1.msra.mxu0 0.0
        %643 = vmatprep.subr.mxu0 0.0
        %644 = vmatpush1.msra.mxu0 0.0
        %645 = vmatprep.subr.mxu0 0.0
        %646 = vmatpush1.msra.mxu0 0.0
        %647 = vmatprep.subr.mxu0 0.0
        %648 = vmatpush1.msra.mxu0 0.0
        %649 = vmatprep.subr.mxu0 0.0
        %650 = vmatpush1.msra.mxu0 0.0
        %651 = vmatprep.subr.mxu0 0.0
        %652 = vmatpush1.msra.mxu0 0.0
        %653 = vmatprep.subr.mxu0 0.0
        %654 = vmatpush1.msra.mxu0 0.0
        %655 = vmatprep.subr.mxu0 0.0
        %656 = vmatpush1.msra.mxu0 0.0
        %657 = vmatprep.subr.mxu0 0.0
        %658 = vmatpush1.msra.mxu0 0.0
        %659 = vmatprep.subr.mxu0 0.0
        %660 = vmatpush1.msra.mxu0 0.0
        %661 = vmatprep.subr.mxu0 0.0
        %662 = vmatpush1.msra.mxu0 0.0
        %663 = vmatprep.subr.mxu0 0.0
        %664 = vmatpush1.msra.mxu0 0.0
        %665 = vmatprep.subr.mxu0 0.0
        %666 = vmatpush1.msra.mxu0 0.0
        %667 = vmatprep.subr.mxu0 0.0
        %668 = vmatpush1.msra.mxu0 0.0
        %669 = vmatprep.subr.mxu0 0.0
        %670 = vmatpush1.msra.mxu0 0.0
        %671 = vmatprep.subr.mxu0 0.0
        %672 = vmatpush1.msra.mxu0 0.0
        %673 = vmatprep.subr.mxu0 0.0
        %674 = vmatpush1.msra.mxu0 0.0
        %675 = vmatprep.subr.mxu0 0.0
        %676 = vmatpush1.msra.mxu0 0.0
        %677 = vmatprep.subr.mxu0 0.0
        %678 = vmatpush1.msra.mxu0 0.0
        %679 = vmatprep.subr.mxu0 0.0
        %680 = vmatpush1.msra.mxu0 0.0
        %681 = vmatprep.subr.mxu0 0.0
        %682 = vmatpush1.msra.mxu0 0.0
        %683 = vmatprep.subr.mxu0 0.0
        %684 = vmatpush1.msra.mxu0 0.0
        %685 = vmatprep.subr.mxu0 0.0
        %686 = vmatpush1.msra.mxu0 0.0
        %687 = vmatprep.subr.mxu0 0.0
        %688 = vmatpush1.msra.mxu0 0.0
        %689 = vmatprep.mubr.f32.mxu0 0.0
        %690 = vmatmul.mubr.f32.gmra.mrb[0].mxu0 %v613
        %v691 = vpop.f32.mrb[0].mxu0
        %v692 = vadd.f32 %v604, %v691
        %v693 = vpop.f32.mrb[0].mxu0
        %v694 = vadd.f32 %v604, %v693
        %695 = vmatprep.mubr.f32.mxu0 0.0
        %696 = vmatmul.mubr.f32.gmra.mrb[0].mxu0 %v616
        %v697 = vpop.f32.mrb[0].mxu0
        %v698 = vadd.f32 %v609, %v697
        %v699 = vpop.f32.mrb[0].mxu0
        %v700 = vadd.f32 %v609, %v699
        %701 = vdwg.mxu0
        %v702 = vmax.f32 %v692, 0.0
        %v703 = vmax.f32 %v694, 0.0
        %v704 = vmax.f32 %v698, 0.0
        %v705 = vmax.f32 %v700, 0.0
        %v706 = vld [vmem:[%s8] sm:$0xff]
        %v707 = vld [vmem:[%s8 + $0x8] sm:$0xff]
        %v708 = vld [vmem:[%s8 + $0x10] sm:$0xff]
        %v709 = vld [vmem:[%s9] sm:$0xff]
        %v710 = vld [vmem:[%s9 + $0x8] sm:$0xff]
        %v711 = vld [vmem:[%s9 + $0x10] sm:$0xff]
        %713 = vset.pattern.permute.xlu0 0
        %714 = vperm.xlu0 %713, %v709
        %v715 = vpop.permute.xlu0 %714
        %718 = vset.pattern.permute.xlu0 0
        %719 = vperm.xlu0 %718, %v710
        %v720 = vpop.permute.xlu0 %719
        %723 = vset.pattern.permute.xlu0 0
        %724 = vperm.xlu0 %723, %v711
        %v725 = vpop.permute.xlu0 %724
        %v728 = vsel %vm611, %v706, 0
        %v731 = vsel %vm611, %v707, 0
        %v734 = vsel %vm611, %v708, 0
        %v737 = vsel %vm618, %v704, 0
        %v740 = vsel %vm618, %v705, 0
        %742 = vmatprep.subr.mxu0 %v703
        %743 = vmatpush1.msra.mxu0 %v702
        %744 = vmatprep.subr.mxu0 %v740
        %745 = vmatpush1.msra.mxu0 %v737
        %746 = vmatprep.subr.mxu0 0.0
        %747 = vmatpush1.msra.mxu0 0.0
        %748 = vmatprep.subr.mxu0 0.0
        %749 = vmatpush1.msra.mxu0 0.0
        %750 = vmatprep.subr.mxu0 0.0
        %751 = vmatpush1.msra.mxu0 0.0
        %752 = vmatprep.subr.mxu0 0.0
        %753 = vmatpush1.msra.mxu0 0.0
        %754 = vmatprep.subr.mxu0 0.0
        %755 = vmatpush1.msra.mxu0 0.0
        %756 = vmatprep.subr.mxu0 0.0
        %757 = vmatpush1.msra.mxu0 0.0
        %758 = vmatprep.subr.mxu0 0.0
        %759 = vmatpush1.msra.mxu0 0.0
        %760 = vmatprep.subr.mxu0 0.0
        %761 = vmatpush1.msra.mxu0 0.0
        %762 = vmatprep.subr.mxu0 0.0
        %763 = vmatpush1.msra.mxu0 0.0
        %764 = vmatprep.subr.mxu0 0.0
        %765 = vmatpush1.msra.mxu0 0.0
        %766 = vmatprep.subr.mxu0 0.0
        %767 = vmatpush1.msra.mxu0 0.0
        %768 = vmatprep.subr.mxu0 0.0
        %769 = vmatpush1.msra.mxu0 0.0
        %770 = vmatprep.subr.mxu0 0.0
        %771 = vmatpush1.msra.mxu0 0.0
        %772 = vmatprep.subr.mxu0 0.0
        %773 = vmatpush1.msra.mxu0 0.0
        %774 = vmatprep.subr.mxu0 0.0
        %775 = vmatpush1.msra.mxu0 0.0
        %776 = vmatprep.subr.mxu0 0.0
        %777 = vmatpush1.msra.mxu0 0.0
        %778 = vmatprep.subr.mxu0 0.0
        %779 = vmatpush1.msra.mxu0 0.0
        %780 = vmatprep.subr.mxu0 0.0
        %781 = vmatpush1.msra.mxu0 0.0
        %782 = vmatprep.subr.mxu0 0.0
        %783 = vmatpush1.msra.mxu0 0.0
        %784 = vmatprep.subr.mxu0 0.0
        %785 = vmatpush1.msra.mxu0 0.0
        %786 = vmatprep.subr.mxu0 0.0
        %787 = vmatpush1.msra.mxu0 0.0
        %788 = vmatprep.subr.mxu0 0.0
        %789 = vmatpush1.msra.mxu0 0.0
        %790 = vmatprep.subr.mxu0 0.0
        %791 = vmatpush1.msra.mxu0 0.0
        %792 = vmatprep.subr.mxu0 0.0
        %793 = vmatpush1.msra.mxu0 0.0
        %794 = vmatprep.subr.mxu0 0.0
        %795 = vmatpush1.msra.mxu0 0.0
        %796 = vmatprep.subr.mxu0 0.0
        %797 = vmatpush1.msra.mxu0 0.0
        %798 = vmatprep.subr.mxu0 0.0
        %799 = vmatpush1.msra.mxu0 0.0
        %800 = vmatprep.subr.mxu0 0.0
        %801 = vmatpush1.msra.mxu0 0.0
        %802 = vmatprep.subr.mxu0 0.0
        %803 = vmatpush1.msra.mxu0 0.0
        %804 = vmatprep.subr.mxu0 0.0
        %805 = vmatpush1.msra.mxu0 0.0
        %806 = vmatprep.mubr.f32.mxu0 0.0
        %807 = vmatmul.mubr.f32.gmra.mrb[0].mxu0 %v728
        %v808 = vpop.f32.mrb[0].mxu0
        %v809 = vadd.f32 %v715, %v808
        %v810 = vpop.f32.mrb[0].mxu0
        %v811 = vadd.f32 %v715, %v810
        %812 = vmatprep.mubr.f32.mxu0 0.0
        %813 = vmatmul.mubr.f32.gmra.mrb[0].mxu0 %v731
        %v814 = vpop.f32.mrb[0].mxu0
        %v815 = vadd.f32 %v720, %v814
        %v816 = vpop.f32.mrb[0].mxu0
        %v817 = vadd.f32 %v720, %v816
        %818 = vmatprep.mubr.f32.mxu0 0.0
        %819 = vmatmul.mubr.f32.gmra.mrb[0].mxu0 %v734
        %v820 = vpop.f32.mrb[0].mxu0
        %v821 = vadd.f32 %v725, %v820
        %v822 = vpop.f32.mrb[0].mxu0
        %v823 = vadd.f32 %v725, %v822
        %824 = vdwg.mxu0
        %v825 = vxor.u32 %v809, 2147483648
        %v826 = vxor.u32 %v811, 2147483648
        %v827 = vxor.u32 %v815, 2147483648
        %v828 = vxor.u32 %v817, 2147483648
        %v829 = vxor.u32 %v821, 2147483648
        %v830 = vxor.u32 %v823, 2147483648
        %v831 = vmul.f32 %v825, 1.442695
        %v832 = vpow.pop %v831
        %v833 = vmul.f32 %v826, 1.442695
        %v834 = vpow.pop %v833
        %v835 = vmul.f32 %v827, 1.442695
        %v836 = vpow.pop %v835
        %v837 = vmul.f32 %v828, 1.442695
        %v838 = vpow.pop %v837
        %v839 = vmul.f32 %v829, 1.442695
        %v840 = vpow.pop %v839
        %v841 = vmul.f32 %v830, 1.442695
        %v842 = vpow.pop %v841
        %v843 = vadd.f32 %v832, 1.0
        %v844 = vadd.f32 %v834, 1.0
        %v845 = vadd.f32 %v836, 1.0
        %v846 = vadd.f32 %v838, 1.0
        %v847 = vadd.f32 %v840, 1.0
        %v848 = vadd.f32 %v842, 1.0
        %v849 = vrcp.pop %v843
        %v850 = vmul.f32 1.0, %v849
        %v851 = vrcp.pop %v844
        %v852 = vmul.f32 1.0, %v851
        %v853 = vrcp.pop %v845
        %v854 = vmul.f32 1.0, %v853
        %v855 = vrcp.pop %v846
        %v856 = vmul.f32 1.0, %v855
        %v857 = vrcp.pop %v847
        %v858 = vmul.f32 1.0, %v857
        %v859 = vrcp.pop %v848
        %v860 = vmul.f32 1.0, %v859
        %v861 = vld [vmem:[%s470] sm:$0xff]
        %v864 = vcombine.low %v850, %v852
        %v866 = vmul.f32 %v861, %v864
        %v867 = vld [vmem:[%s479] sm:$0x3]
        %v869 = vlaneseq
        %v870 = vshrl.u32 %v869, 7
        %v871 = vsub.s32 0, %v870
        %v872 = vrot.slane %v867, %v871
        %v873 = vlaneseq
        %v874 = vshrl.u32 %v873, 7
        %v875 = vsub.s32 1, %v874
        %v876 = vrot.slane %v867, %v875
        %v879 = vmul.f32 %v872, %v854
        %v880 = vmul.f32 %v876, %v856
        %v883 = vcombine.low %v879, %v880
        %v885 = vadd.f32 %v866, %v883
        %v886 = vld [vmem:[%s488] sm:$0x3]
        %v888 = vlaneseq
        %v889 = vshrl.u32 %v888, 7
        %v890 = vsub.s32 0, %v889
        %v891 = vrot.slane %v886, %v890
        %v892 = vlaneseq
        %v893 = vshrl.u32 %v892, 7
        %v894 = vsub.s32 1, %v893
        %v895 = vrot.slane %v886, %v894
        %v898 = vmul.f32 %v891, %v858
        %v899 = vmul.f32 %v895, %v860
        %v902 = vcombine.low %v898, %v899
        %v904 = vadd.f32 %v885, %v902
        %905 = vst [vmem:[%s451] sm:$0xff] %v904
        %s906 = sand.u32 %s284, 1
        %s907 = scalar_lea.sflag [#allocation3], %s906
        %s908 = sand.u32 %s284, 1
        %s909 = smul.addr %s908, 8
        %s910 = scalar_lea.vmem [#allocation2], %s909
        // Predicated region
        $region61: #{tpu_custom_call.1} parent=59 // pred_check
          %p911 = pneg %p294
        $region62: #{tpu_custom_call.1} parent=59 // pred_check_branch
          %913 = sbr.rel (%p911) target = $region64
        $region63: #{tpu_custom_call.1} parent=59 // pred_region
          %s914 = smul.u32 2, %s29
          %s916 = ssub.s32 128, 128
          %917 = vsyncadd %s907, %s916
          %s918 = smul.addr %s28, 2
          %s919 = sadd.s32 %s914, %s918
          %s920 = smul.addr %s919, 64
          %s921 = scalar_lea.hbm %s10, %s920
          %s923 = sshll.u32 %s910, 4
          %s924 = int_to_ptr.vmem [resolvable:$true] %s923
          %926 = dma.vmem_to_hbm [thread:$0]  %s924, 128, %s921, %s907
        $region64: #{tpu_custom_call.1} parent=59 // pred_fallthru
          _
      $region60: #{tpu_custom_call.1} parent=5 // pred_fallthru
        _
      %p927 = scmp.le.s32.totalorder 2, %s19
      // Predicated region
      $region65: #{tpu_custom_call.1} parent=5 // pred_check
        %p928 = pneg %p927
      $region66: #{tpu_custom_call.1} parent=5 // pred_check_branch
        %930 = sbr.rel (%p928) target = $region68
      $region67: #{tpu_custom_call.1} parent=5 // pred_region
        %s931 = ssub.s32 %s19, 2
        // Predicated region
        $region69: #{tpu_custom_call.1} parent=67 // pred_check
          %p932 = pneg %p300
        $region70: #{tpu_custom_call.1} parent=67 // pred_check_branch
          %934 = sbr.rel (%p932) target = $region72
        $region71: #{tpu_custom_call.1} parent=67 // pred_region
          %s935 = sand.u32 %s285, 1
          %s936 = scalar_lea.sflag [#allocation3], %s935
          %s937 = sand.u32 %s285, 1
          %s938 = smul.addr %s937, 8
          %s939 = scalar_lea.vmem [#allocation2], %s938
          %940 = dma.done %s936, 128
        $region72: #{tpu_custom_call.1} parent=67 // pred_fallthru
          _
      $region68: #{tpu_custom_call.1} parent=5 // pred_fallthru
        _
    $region6: #{tpu_custom_call.1} parent=1 // loop_footer
      %s23 = sadd.s32 1, %s19
    $region7: #{tpu_custom_call.1} parent=1 // loop_footer_branch
      %18 = sbr.rel target = $region3
    $region8: #{tpu_custom_call.1} parent=1 // loop_exit
      _
    %941 = vsyncpa [#allocation3], 1
    %s942 = scalar_lea.sflag [#allocation3], 1
    %943 = vsyncpa %s942, 1

</llo_original>
